<compile_context>
chip_gen: v5e
topology: v5e:2x2
jax: 0.10.0
libtpu: 0.0.40
codegen_flags: <defaults>
</compile_context>

<pallas_src>
import jax
import jax.numpy as jnp
from jax.experimental import pallas as pl
from jax.experimental.pallas import tpu as pltpu


def _round_up(x, m):
    return (x + m - 1) // m * m


def _leaky_relu(v, negative_slope=0.2):
    return jnp.where(v > 0, v, negative_slope * v)


def decoder_kernel(z_ref, w1_ref, b1_ref, w2_ref, b2_ref, w3_ref, b3_ref, out_ref):
    # fc_1 -> LeakyReLU(0.2)   (bf16 MXU operands, f32 accumulation + epilogue)
    h = jnp.dot(z_ref[...], w1_ref[...], preferred_element_type=jnp.float32)
    h = _leaky_relu(h + b1_ref[...])
    # fc_2 -> LeakyReLU(0.2)
    h = jnp.dot(h.astype(w2_ref.dtype), w2_ref[...], preferred_element_type=jnp.float32)
    h = _leaky_relu(h + b2_ref[...])
    # fc_3 -> sigmoid (EUP). Output feature dim is the full 784 (no padding):
    # 6 of every 7 128-lane store groups stay unmasked, and no depad pass
    # is needed after the kernel.
    logits = jnp.dot(h.astype(w3_ref.dtype), w3_ref[...], preferred_element_type=jnp.float32)
    out_ref[...] = jax.nn.sigmoid(logits + b3_ref[...]).astype(out_ref.dtype)


def init_decoder_params(key, latent_dim, hidden_dim, output_dim):
    """PyTorch-style nn.Linear init (uniform +/- 1/sqrt(fan_in)).

    Weights are stored transposed as [in_features, out_features]."""
    def linear(k, fan_in, fan_out):
        kw, kb = jax.random.split(k)
        bound = 1.0 / jnp.sqrt(jnp.float32(fan_in))
        w = jax.random.uniform(kw, (fan_in, fan_out), jnp.float32, -bound, bound)
        b = jax.random.uniform(kb, (1, fan_out), jnp.float32, -bound, bound)
        return w, b

    k1, k2, k3 = jax.random.split(key, 3)
    return {
        "fc_1": linear(k1, latent_dim, hidden_dim),
        "fc_2": linear(k2, hidden_dim, hidden_dim),
        "fc_3": linear(k3, hidden_dim, output_dim),
    }


def prepare_decoder_params(params, use_bf16=True):
    """One-time weight preprocessing, hoisted out of the per-call forward.

    Casts MXU operands (weights) to bf16; biases stay f32 for the f32 epilogue.
    bf16 MXU inputs with f32 accumulation differ from the f32 PyTorch
    reference at ~1e-2 relative tolerance; pass use_bf16=False for exact-ish
    f32 matmuls."""
    mxu_dtype = jnp.bfloat16 if use_bf16 else jnp.float32
    return {name: (w.astype(mxu_dtype), b.astype(jnp.float32))
            for name, (w, b) in params.items()}


def decoder_forward(z, prepped_params, *, out_chw=(1, 28, 28), tile_b=512,
                    out_dtype=jnp.float32):
    """z: [B, latent_dim] -> x_hat: [B, 1, 28, 28] (matches Decoder.forward)."""
    B, latent_dim = z.shape
    C, H, W = out_chw
    output_dim = C * H * W

    w1, b1 = prepped_params["fc_1"]
    w2, b2 = prepped_params["fc_2"]
    w3, b3 = prepped_params["fc_3"]
    hidden_dim = w1.shape[1]
    assert w3.shape[1] == output_dim

    z_in = z.astype(w1.dtype)

    # Batch tiling: large pipelined tiles for big batches; cap the tile at
    # ~ceil(B/2) (sublane-aligned) so the grid has >=2 steps whenever possible
    # and the "parallel" batch axis can be split across v7x's two TensorCores.
    # Only the batch rows get (zero) padding; it is sliced off below.
    tb = min(tile_b, max(8, _round_up(pl.cdiv(B, 2), 8)))
    b_pad = _round_up(B, tb)
    if b_pad != B:
        z_in = jnp.pad(z_in, ((0, b_pad - B), (0, 0)))
    grid = (b_pad // tb,)

    def const(shape):
        # Weights/biases: one block covering the whole array with a constant
        # index map -> DMA'd once, VMEM-resident across all grid steps.
        # (For large hidden dims, pipeline_mode=pl.Buffered(1) would halve the
        #  resident-weight VMEM footprint; irrelevant at hidden=32.)
        return pl.BlockSpec(shape, lambda i: (0, 0))

    out_itemsize = jnp.dtype(out_dtype).itemsize
    cost = pl.CostEstimate(
        flops=2 * b_pad * hidden_dim * (latent_dim + hidden_dim + output_dim),
        transcendentals=b_pad * output_dim,  # sigmoid
        bytes_accessed=(int(z_in.size) * z_in.dtype.itemsize
                        + sum(int(a.size) * a.dtype.itemsize
                              for a in (w1, b1, w2, b2, w3, b3))
                        + b_pad * output_dim * out_itemsize),
    )

    x_hat_flat = pl.pallas_call(
        decoder_kernel,
        out_shape=jax.ShapeDtypeStruct((b_pad, output_dim), out_dtype),
        grid=grid,
        in_specs=[
            pl.BlockSpec((tb, latent_dim), lambda i: (i, 0)),            # z tile
            const((latent_dim, hidden_dim)), const((1, hidden_dim)),    # fc_1
            const((hidden_dim, hidden_dim)), const((1, hidden_dim)),    # fc_2
            const((hidden_dim, output_dim)), const((1, output_dim)),    # fc_3
        ],
        out_specs=pl.BlockSpec((tb, output_dim), lambda i: (i, 0)),
        compiler_params=pltpu.CompilerParams(
            dimension_semantics=("parallel",),   # batch axis -> megacore split
        ),
        cost_estimate=cost,
    )(z_in, w1, b1, w2, b2, w3, b3)

    # [:B] is a no-op when B == b_pad; the .view([-1, 1, 28, 28]) reshape is
    # metadata-only since the kernel already emits the full 784-wide rows.
    x = x_hat_flat if b_pad == B else x_hat_flat[:B]
    return x.reshape(-1, C, H, W)


if __name__ == "__main__":
    # Shapes implied by the module: output_dim = 28*28 = 784 (reshaped to
    # [-1, 1, 28, 28]); small latent/hidden for the example.
    B = 2
    LATENT = 8
    HIDDEN = 32
    OUTPUT = 28 * 28

    key = jax.random.PRNGKey(0)
    k_params, k_z = jax.random.split(key)

    params = init_decoder_params(k_params, LATENT, HIDDEN, OUTPUT)
    prepped = prepare_decoder_params(params, use_bf16=True)  # hoisted weight cast
    z = jax.random.normal(k_z, (B, LATENT), jnp.float32)

    fwd = jax.jit(lambda zz: decoder_forward(zz, prepped))
    x_hat = fwd(z)
    jax.block_until_ready(x_hat)

    # Pure-JAX f32 reference (same math as the PyTorch module).
    def ref(zz):
        w1, b1 = params["fc_1"]
        w2, b2 = params["fc_2"]
        w3, b3 = params["fc_3"]
        h = zz @ w1 + b1
        h = jnp.where(h > 0, h, 0.2 * h)
        h = h @ w2 + b2
        h = jnp.where(h > 0, h, 0.2 * h)
        return jax.nn.sigmoid(h @ w3 + b3).reshape(-1, 1, 28, 28)

    ref_out = ref(z)

    assert x_hat.shape == (B, 1, 28, 28)
    assert bool(jnp.all(jnp.isfinite(x_hat)))
    assert bool(jnp.all((x_hat >= 0.0) & (x_hat <= 1.0)))            # sigmoid range
    assert bool(jnp.max(jnp.abs(x_hat - ref_out)) < 2e-2)            # bf16 MXU tol

    print("KERNEL_OK")
</pallas_src>

<mosaic_0001>
module attributes {stable_mosaic.version = 11 : i64} {
  func.func @decoder_kernel(%arg0: i32, %arg1: memref<8x8xbf16, #tpu.memory_space<vmem>>, %arg2: memref<8x32xbf16, #tpu.memory_space<vmem>>, %arg3: memref<1x32xf32, #tpu.memory_space<vmem>>, %arg4: memref<32x32xbf16, #tpu.memory_space<vmem>>, %arg5: memref<1x32xf32, #tpu.memory_space<vmem>>, %arg6: memref<32x784xbf16, #tpu.memory_space<vmem>>, %arg7: memref<1x784xf32, #tpu.memory_space<vmem>>, %arg8: memref<8x784xf32, #tpu.memory_space<vmem>>) attributes {dimension_semantics = [#tpu.dimension_semantics<parallel>], iteration_bounds = array<i64: 1>, scalar_prefetch = 0 : i64, scratch_operands = 0 : i64, tpu.core_type = #tpu.core_type<tc>, window_params = [{transform_indices = @transform_0, window_bounds = array<i64: 8, 8>}, {pipeline_mode = #tpu.pipeline_mode<synchronous>, transform_indices = @transform_1, window_bounds = array<i64: 8, 32>}, {pipeline_mode = #tpu.pipeline_mode<synchronous>, transform_indices = @transform_2, window_bounds = array<i64: 1, 32>}, {pipeline_mode = #tpu.pipeline_mode<synchronous>, transform_indices = @transform_3, window_bounds = array<i64: 32, 32>}, {pipeline_mode = #tpu.pipeline_mode<synchronous>, transform_indices = @transform_4, window_bounds = array<i64: 1, 32>}, {pipeline_mode = #tpu.pipeline_mode<synchronous>, transform_indices = @transform_5, window_bounds = array<i64: 32, 784>}, {pipeline_mode = #tpu.pipeline_mode<synchronous>, transform_indices = @transform_6, window_bounds = array<i64: 1, 784>}, {transform_indices = @transform_7, window_bounds = array<i64: 8, 784>}]} {
    %c0 = arith.constant 0 : index
    %c0_0 = arith.constant 0 : index
    %0 = vector.load %arg1[%c0, %c0_0] : memref<8x8xbf16, #tpu.memory_space<vmem>>, vector<8x8xbf16>
    %c0_1 = arith.constant 0 : index
    %c0_2 = arith.constant 0 : index
    %1 = vector.load %arg2[%c0_1, %c0_2] : memref<8x32xbf16, #tpu.memory_space<vmem>>, vector<8x32xbf16>
    %cst = arith.constant dense<0.000000e+00> : vector<8x32xf32>
    %2 = tpu.matmul %0, %1, %cst {dimension_numbers = #tpu.dot_dimension_numbers<[1], [0], [0], [1], [0, 0, 1, 1], [], []>} : vector<8x8xbf16>, vector<8x32xbf16>, vector<8x32xf32> -> vector<8x32xf32>
    %c0_3 = arith.constant 0 : index
    %c0_4 = arith.constant 0 : index
    %3 = vector.load %arg3[%c0_3, %c0_4] : memref<1x32xf32, #tpu.memory_space<vmem>>, vector<1x32xf32>
    %4 = vector.broadcast %3 : vector<1x32xf32> to vector<8x32xf32>
    %5 = arith.addf %2, %4 : vector<8x32xf32>
    %cst_5 = arith.constant 0.000000e+00 : f32
    %6 = vector.broadcast %cst_5 : f32 to vector<8x32xf32>
    %7 = arith.cmpf ogt, %5, %6 : vector<8x32xf32>
    %cst_6 = arith.constant 2.000000e-01 : f32
    %8 = vector.broadcast %cst_6 : f32 to vector<8x32xf32>
    %9 = arith.mulf %8, %5 : vector<8x32xf32>
    %10 = arith.select %7, %5, %9 : vector<8x32xi1>, vector<8x32xf32>
    %11 = arith.truncf %10 : vector<8x32xf32> to vector<8x32xbf16>
    %c0_7 = arith.constant 0 : index
    %c0_8 = arith.constant 0 : index
    %12 = vector.load %arg4[%c0_7, %c0_8] : memref<32x32xbf16, #tpu.memory_space<vmem>>, vector<32x32xbf16>
    %cst_9 = arith.constant dense<0.000000e+00> : vector<8x32xf32>
    %13 = tpu.matmul %11, %12, %cst_9 {dimension_numbers = #tpu.dot_dimension_numbers<[1], [0], [0], [1], [0, 0, 1, 1], [], []>} : vector<8x32xbf16>, vector<32x32xbf16>, vector<8x32xf32> -> vector<8x32xf32>
    %c0_10 = arith.constant 0 : index
    %c0_11 = arith.constant 0 : index
    %14 = vector.load %arg5[%c0_10, %c0_11] : memref<1x32xf32, #tpu.memory_space<vmem>>, vector<1x32xf32>
    %15 = vector.broadcast %14 : vector<1x32xf32> to vector<8x32xf32>
    %16 = arith.addf %13, %15 : vector<8x32xf32>
    %cst_12 = arith.constant 0.000000e+00 : f32
    %17 = vector.broadcast %cst_12 : f32 to vector<8x32xf32>
    %18 = arith.cmpf ogt, %16, %17 : vector<8x32xf32>
    %cst_13 = arith.constant 2.000000e-01 : f32
    %19 = vector.broadcast %cst_13 : f32 to vector<8x32xf32>
    %20 = arith.mulf %19, %16 : vector<8x32xf32>
    %21 = arith.select %18, %16, %20 : vector<8x32xi1>, vector<8x32xf32>
    %22 = arith.truncf %21 : vector<8x32xf32> to vector<8x32xbf16>
    %c0_14 = arith.constant 0 : index
    %c0_15 = arith.constant 0 : index
    %23 = vector.load %arg6[%c0_14, %c0_15] : memref<32x784xbf16, #tpu.memory_space<vmem>>, vector<32x784xbf16>
    %cst_16 = arith.constant dense<0.000000e+00> : vector<8x784xf32>
    %24 = tpu.matmul %22, %23, %cst_16 {dimension_numbers = #tpu.dot_dimension_numbers<[1], [0], [0], [1], [0, 0, 1, 1], [], []>} : vector<8x32xbf16>, vector<32x784xbf16>, vector<8x784xf32> -> vector<8x784xf32>
    %c0_17 = arith.constant 0 : index
    %c0_18 = arith.constant 0 : index
    %25 = vector.load %arg7[%c0_17, %c0_18] : memref<1x784xf32, #tpu.memory_space<vmem>>, vector<1x784xf32>
    %26 = vector.broadcast %25 : vector<1x784xf32> to vector<8x784xf32>
    %27 = arith.addf %24, %26 : vector<8x784xf32>
    %28 = arith.negf %27 : vector<8x784xf32>
    %29 = math.exp %28 : vector<8x784xf32>
    %cst_19 = arith.constant 1.000000e+00 : f32
    %30 = vector.broadcast %cst_19 : f32 to vector<8x784xf32>
    %31 = arith.addf %30, %29 : vector<8x784xf32>
    %32 = arith.divf %30, %31 : vector<8x784xf32>
    %c0_20 = arith.constant 0 : index
    %c0_21 = arith.constant 0 : index
    %33 = vector.load %arg8[%c0_20, %c0_21] : memref<8x784xf32, #tpu.memory_space<vmem>>, vector<8x784xf32>
    tpu.vector_store %arg8[%c0_20, %c0_21], %32 {strides = array<i32>} : memref<8x784xf32, #tpu.memory_space<vmem>>, vector<8x784xf32>,
    return
  }
  func.func @transform_0(%arg0: i32) -> (i32, i32) {
    %c0_i32 = arith.constant 0 : i32
    %c0_i32_0 = arith.constant 0 : i32
    return %arg0, %c0_i32 : i32, i32
  }
  func.func @transform_1(%arg0: i32) -> (i32, i32) {
    %c0_i32 = arith.constant 0 : i32
    %c0_i32_0 = arith.constant 0 : i32
    %c0_i32_1 = arith.constant 0 : i32
    return %c0_i32, %c0_i32_0 : i32, i32
  }
  func.func @transform_2(%arg0: i32) -> (i32, i32) {
    %c0_i32 = arith.constant 0 : i32
    %c0_i32_0 = arith.constant 0 : i32
    %c0_i32_1 = arith.constant 0 : i32
    return %c0_i32, %c0_i32_0 : i32, i32
  }
  func.func @transform_3(%arg0: i32) -> (i32, i32) {
    %c0_i32 = arith.constant 0 : i32
    %c0_i32_0 = arith.constant 0 : i32
    %c0_i32_1 = arith.constant 0 : i32
    return %c0_i32, %c0_i32_0 : i32, i32
  }
  func.func @transform_4(%arg0: i32) -> (i32, i32) {
    %c0_i32 = arith.constant 0 : i32
    %c0_i32_0 = arith.constant 0 : i32
    %c0_i32_1 = arith.constant 0 : i32
    return %c0_i32, %c0_i32_0 : i32, i32
  }
  func.func @transform_5(%arg0: i32) -> (i32, i32) {
    %c0_i32 = arith.constant 0 : i32
    %c0_i32_0 = arith.constant 0 : i32
    %c0_i32_1 = arith.constant 0 : i32
    return %c0_i32, %c0_i32_0 : i32, i32
  }
  func.func @transform_6(%arg0: i32) -> (i32, i32) {
    %c0_i32 = arith.constant 0 : i32
    %c0_i32_0 = arith.constant 0 : i32
    %c0_i32_1 = arith.constant 0 : i32
    return %c0_i32, %c0_i32_0 : i32, i32
  }
  func.func @transform_7(%arg0: i32) -> (i32, i32) {
    %c0_i32 = arith.constant 0 : i32
    %c0_i32_0 = arith.constant 0 : i32
    return %arg0, %c0_i32 : i32, i32
  }
}

</mosaic_0001>

<llo_original>
// kernel: _lambda_.1
$region0: #{_lambda_.1}
  #allocation0 [shape = 'u32[]', space=smem, size = 0x4, offset = 0x4, fixed_abs, tag = 'smem constant byte address 0x4 - core index']
  #allocation1 [shape = 'u32[72,128]{1,0:T(1,128)}', space=vmem, size = 0x9000, scoped, tag = 'internal scratch']
  %s0 = inlined_call_operand.vmem [shape: bf16[8,8], index: 0, kind: input, shape index: {}]
  %s1 = inlined_call_operand.vmem [shape: bf16[8,32], index: 1, kind: input, shape index: {}]
  %s2 = inlined_call_operand.vmem [shape: f32[1,32], index: 2, kind: input, shape index: {}]
  %s3 = inlined_call_operand.hbm [shape: bf16[32,32], index: 3, kind: input, shape index: {}]
  %s4 = inlined_call_operand.vmem [shape: f32[1,32], index: 4, kind: input, shape index: {}]
  %s5 = inlined_call_operand.hbm [shape: bf16[32,784], index: 5, kind: input, shape index: {}]
  %s6 = inlined_call_operand.vmem [shape: f32[1,784], index: 6, kind: input, shape index: {}]
  %s7 = inlined_call_operand.vmem [shape: f32[8,784], index: 7, kind: output, shape index: {}]
  %s8 = sld [smem:[#allocation0]]
  $region46: #{_lambda_.1} parent=0
    _
  %s10 = ssub.s32 1, %s8
  %s11 = scalar_select 0, %s10, %s8
  $region1: #{_lambda_.1} parent=0
    #allocation2 [shape = 'u8[8192]{0}', space=vmem, size = 0x2000, scoped, tag = 'input window, operand 3, single buffered']
    #allocation3 [shape = 's32[1]{0}', space=sflag, size = 0x4, scoped, tag = 'scoped memory for _lambda_.1']
    #allocation4 [shape = 'u8[57344]{0}', space=vmem, size = 0xe000, scoped, tag = 'input window, operand 5, single buffered']
    #allocation5 [shape = 's32[1]{0}', space=sflag, size = 0x4, scoped, tag = 'scoped memory for _lambda_.1']
    %12 = vsyncpa [#allocation3], 0
    %13 = vsyncpa [#allocation5], 0
    // Predicated region
    $region2: #{_lambda_.1} parent=1 // pred_check
      _
    $region3: #{_lambda_.1} parent=1 // pred_check_branch
      %15 = sbr.rel (0) target = $region5
    $region4: #{_lambda_.1} parent=1 // pred_region
      _
    $region5: #{_lambda_.1} parent=1 // pred_fallthru
      _
    // Predicated region
    $region6: #{_lambda_.1} parent=1 // pred_check
      _
    $region7: #{_lambda_.1} parent=1 // pred_check_branch
      %17 = sbr.rel (0) target = $region9
    $region8: #{_lambda_.1} parent=1 // pred_region
      _
    $region9: #{_lambda_.1} parent=1 // pred_fallthru
      _
    // Predicated region
    $region10: #{_lambda_.1} parent=1 // pred_check
      _
    $region11: #{_lambda_.1} parent=1 // pred_check_branch
      %19 = sbr.rel (0) target = $region13
    $region12: #{_lambda_.1} parent=1 // pred_region
      _
    $region13: #{_lambda_.1} parent=1 // pred_fallthru
      _
    // Predicated region
    $region14: #{_lambda_.1} parent=1 // pred_check
      _
    $region15: #{_lambda_.1} parent=1 // pred_check_branch
      %21 = sbr.rel (0) target = $region17
    $region16: #{_lambda_.1} parent=1 // pred_region
      %23 = vsyncadd [#allocation3], 0
      %s24 = sshll.u32 %s3, 4
      %s25 = int_to_ptr.hbm [resolvable:$true] %s24
      %s26 = sshll.u32 [#allocation2], 4
      %s27 = int_to_ptr.vmem [resolvable:$true] %s26
      %32 = dma.hbm_to_vmem [thread:$0]  %s25, 256, %s27, [#allocation3], 64, 64, 4
    $region17: #{_lambda_.1} parent=1 // pred_fallthru
      _
    // Predicated region
    $region18: #{_lambda_.1} parent=1 // pred_check
      _
    $region19: #{_lambda_.1} parent=1 // pred_check_branch
      %34 = sbr.rel (0) target = $region21
    $region20: #{_lambda_.1} parent=1 // pred_region
      _
    $region21: #{_lambda_.1} parent=1 // pred_fallthru
      _
    // Predicated region
    $region22: #{_lambda_.1} parent=1 // pred_check
      _
    $region23: #{_lambda_.1} parent=1 // pred_check_branch
      %36 = sbr.rel (0) target = $region25
    $region24: #{_lambda_.1} parent=1 // pred_region
      %38 = vsyncadd [#allocation5], 0
      %s39 = sshll.u32 %s5, 4
      %s40 = int_to_ptr.hbm [resolvable:$true] %s39
      %s41 = sshll.u32 [#allocation4], 4
      %s42 = int_to_ptr.vmem [resolvable:$true] %s41
      %47 = dma.hbm_to_vmem [thread:$0]  %s40, 1792, %s42, [#allocation5], 448, 448, 28
    $region25: #{_lambda_.1} parent=1 // pred_fallthru
      _
    // Predicated region
    $region26: #{_lambda_.1} parent=1 // pred_check
      _
    $region27: #{_lambda_.1} parent=1 // pred_check_branch
      %49 = sbr.rel (0) target = $region29
    $region28: #{_lambda_.1} parent=1 // pred_region
      _
    $region29: #{_lambda_.1} parent=1 // pred_fallthru
      _
    // Predicated region
    $region30: #{_lambda_.1} parent=1 // pred_check
      _
    $region31: #{_lambda_.1} parent=1 // pred_check_branch
      %51 = sbr.rel (0) target = $region33
    $region32: #{_lambda_.1} parent=1 // pred_region
      %53 = dma.done [#allocation3], 256
    $region33: #{_lambda_.1} parent=1 // pred_fallthru
      _
    // Predicated region
    $region34: #{_lambda_.1} parent=1 // pred_check
      _
    $region35: #{_lambda_.1} parent=1 // pred_check_branch
      %55 = sbr.rel (0) target = $region37
    $region36: #{_lambda_.1} parent=1 // pred_region
      %57 = dma.done [#allocation5], 1792
    $region37: #{_lambda_.1} parent=1 // pred_fallthru
      _
    %v59 = vld [vmem:[%s0] sm:$0xf]
    %v60 = vld [vmem:[%s1] sm:$0xf]
    %v61 = vld [vmem:[%s2] sm:$0x1]
    %v63 = vperm.slane %v61, 0
    %vm65 = vcmask 64512
    %v67 = vsel %vm65, %v59, 0
    %vm69 = vcmask 1043456
    %v71 = vsel %vm69, %v60, 0
    %73 = vmatpush.bf16.msra.mxu0 0
    %74 = vmatpush.bf16.msra.mxu0 0
    %75 = vmatpush.bf16.msra.mxu0 0
    %76 = vmatpush.bf16.msra.mxu0 0
    %77 = vmatpush.bf16.msra.mxu0 0
    %78 = vmatpush.bf16.msra.mxu0 0
    %79 = vmatpush.bf16.msra.mxu0 0
    %80 = vmatpush.bf16.msra.mxu0 %v71
    %81 = vmatmul.bf16.gmra.mxu0 %v67
    %v82 = vpop.f32.mrf.mxu0
    %v83 = vadd.f32 %v63, %v82
    %v84 = vpop.f32.mrf.mxu0
    %85 = vdwg.mxu0
    %vm86 = vcmp.gt.f32.partialorder %v83, 0.0
    %v87 = vmul.f32 %v83, 0.2
    %v88 = vsel %vm86, %v83, %v87
    %v89 = vpack.c.bf16 %v88, %v88
    %v90 = vld [vmem:[#allocation2] sm:$0xf]
    %v91 = vld [vmem:[#allocation2 + $0x4] sm:$0xf]
    %v92 = vld [vmem:[#allocation2 + $0x8] sm:$0xf]
    %v93 = vld [vmem:[#allocation2 + $0xc] sm:$0xf]
    %v94 = vld [vmem:[%s4] sm:$0x1]
    %v96 = vperm.slane %v94, 0
    %v102 = vunpack.c.l.b16 %v90
    %v103 = vunpack.c.l.b16 %v91
    %v104 = vunpack.c.l.b16 %v92
    %v105 = vunpack.c.l.b16 %v93
    %v106 = vpack.c.b16 %v103, %v102
    %v107 = vpack.c.b16 %v105, %v104
    %vm110 = vcmask 261120
    %v112 = vsel %vm110, %v89, 0
    %114 = vmatpush.bf16.msra.mxu0 0
    %115 = vmatpush.bf16.msra.mxu0 0
    %116 = vmatpush.bf16.msra.mxu0 0
    %117 = vmatpush.bf16.msra.mxu0 0
    %118 = vmatpush.bf16.msra.mxu0 0
    %119 = vmatpush.bf16.msra.mxu0 0
    %120 = vmatpush.bf16.msra.mxu0 %v107
    %121 = vmatpush.bf16.msra.mxu0 %v106
    %122 = vmatmul.bf16.gmra.mxu0 %v112
    %v123 = vpop.f32.mrf.mxu0
    %v124 = vadd.f32 %v96, %v123
    %v125 = vpop.f32.mrf.mxu0
    %126 = vdwg.mxu0
    %vm127 = vcmp.gt.f32.partialorder %v124, 0.0
    %v128 = vmul.f32 %v124, 0.2
    %v129 = vsel %vm127, %v124, %v128
    %v130 = vpack.c.bf16 %v129, %v129
    %v131 = vld [vmem:[#allocation4] sm:$0xff]
    %v132 = vld [vmem:[#allocation4 + $0x8] sm:$0xff]
    %v133 = vld [vmem:[#allocation4 + $0x10] sm:$0xff]
    %v134 = vld [vmem:[#allocation4 + $0x18] sm:$0xf]
    %v135 = vld [vmem:[#allocation4 + $0x1c] sm:$0xff]
    %v136 = vld [vmem:[#allocation4 + $0x24] sm:$0xff]
    %v137 = vld [vmem:[#allocation4 + $0x2c] sm:$0xff]
    %v138 = vld [vmem:[#allocation4 + $0x34] sm:$0xf]
    %v139 = vld [vmem:[#allocation4 + $0x38] sm:$0xff]
    %v140 = vld [vmem:[#allocation4 + $0x40] sm:$0xff]
    %v141 = vld [vmem:[#allocation4 + $0x48] sm:$0xff]
    %v142 = vld [vmem:[#allocation4 + $0x50] sm:$0xf]
    %v143 = vld [vmem:[#allocation4 + $0x54] sm:$0xff]
    %v144 = vld [vmem:[#allocation4 + $0x5c] sm:$0xff]
    %v145 = vld [vmem:[#allocation4 + $0x64] sm:$0xff]
    %v146 = vld [vmem:[#allocation4 + $0x6c] sm:$0xf]
    %v147 = vld [vmem:[%s6] sm:$0x7f]
    %v149 = vperm.slane %v147, 0
    %v150 = vperm.slane %v147, 1
    %v151 = vperm.slane %v147, 2
    %v152 = vperm.slane %v147, 3
    %v153 = vperm.slane %v147, 4
    %v154 = vperm.slane %v147, 5
    %v155 = vperm.slane %v147, 6
    %v179 = vunpack.c.l.b16 %v131
    %v180 = vunpack.c.h.b16 %v131
    %v181 = vunpack.c.l.b16 %v132
    %v182 = vunpack.c.h.b16 %v132
    %v183 = vunpack.c.l.b16 %v133
    %v184 = vunpack.c.h.b16 %v133
    %v185 = vunpack.c.l.b16 %v134
    %v186 = vunpack.c.l.b16 %v135
    %v187 = vunpack.c.h.b16 %v135
    %v188 = vunpack.c.l.b16 %v136
    %v189 = vunpack.c.h.b16 %v136
    %v190 = vunpack.c.l.b16 %v137
    %v191 = vunpack.c.h.b16 %v137
    %v192 = vunpack.c.l.b16 %v138
    %v193 = vunpack.c.l.b16 %v139
    %v194 = vunpack.c.h.b16 %v139
    %v195 = vunpack.c.l.b16 %v140
    %v196 = vunpack.c.h.b16 %v140
    %v197 = vunpack.c.l.b16 %v141
    %v198 = vunpack.c.h.b16 %v141
    %v199 = vunpack.c.l.b16 %v142
    %v200 = vunpack.c.l.b16 %v143
    %v201 = vunpack.c.h.b16 %v143
    %v202 = vunpack.c.l.b16 %v144
    %v203 = vunpack.c.h.b16 %v144
    %v204 = vunpack.c.l.b16 %v145
    %v205 = vunpack.c.h.b16 %v145
    %v206 = vunpack.c.l.b16 %v146
    %v207 = vpack.c.b16 %v186, %v179
    %v208 = vpack.c.b16 %v187, %v180
    %v209 = vpack.c.b16 %v188, %v181
    %v210 = vpack.c.b16 %v189, %v182
    %v211 = vpack.c.b16 %v190, %v183
    %v212 = vpack.c.b16 %v191, %v184
    %v213 = vpack.c.b16 %v192, %v185
    %v214 = vpack.c.b16 %v200, %v193
    %v215 = vpack.c.b16 %v201, %v194
    %v216 = vpack.c.b16 %v202, %v195
    %v217 = vpack.c.b16 %v203, %v196
    %v218 = vpack.c.b16 %v204, %v197
    %v219 = vpack.c.b16 %v205, %v198
    %v220 = vpack.c.b16 %v206, %v199
    %v236 = vsel %vm110, %v130, 0
    %238 = vmatpush.bf16.msra.mxu0 0
    %239 = vmatpush.bf16.msra.mxu0 0
    %240 = vmatpush.bf16.msra.mxu0 0
    %241 = vmatpush.bf16.msra.mxu0 0
    %242 = vmatpush.bf16.msra.mxu0 0
    %243 = vmatpush.bf16.msra.mxu0 0
    %244 = vmatpush.bf16.msra.mxu0 %v214
    %245 = vmatpush.bf16.msra.mxu0 %v207
    %246 = vmatmul.bf16.gmra.mxu0 %v236
    %v247 = vpop.f32.mrf.mxu0
    %v248 = vadd.f32 %v149, %v247
    %v249 = vpop.f32.mrf.mxu0
    %250 = vdwg.mxu0
    %251 = vmatpush.bf16.msra.mxu0 0
    %252 = vmatpush.bf16.msra.mxu0 0
    %253 = vmatpush.bf16.msra.mxu0 0
    %254 = vmatpush.bf16.msra.mxu0 0
    %255 = vmatpush.bf16.msra.mxu0 0
    %256 = vmatpush.bf16.msra.mxu0 0
    %257 = vmatpush.bf16.msra.mxu0 %v215
    %258 = vmatpush.bf16.msra.mxu0 %v208
    %259 = vmatmul.bf16.gmra.mxu0 %v236
    %v260 = vpop.f32.mrf.mxu0
    %v261 = vadd.f32 %v150, %v260
    %v262 = vpop.f32.mrf.mxu0
    %263 = vdwg.mxu0
    %264 = vmatpush.bf16.msra.mxu0 0
    %265 = vmatpush.bf16.msra.mxu0 0
    %266 = vmatpush.bf16.msra.mxu0 0
    %267 = vmatpush.bf16.msra.mxu0 0
    %268 = vmatpush.bf16.msra.mxu0 0
    %269 = vmatpush.bf16.msra.mxu0 0
    %270 = vmatpush.bf16.msra.mxu0 %v216
    %271 = vmatpush.bf16.msra.mxu0 %v209
    %272 = vmatmul.bf16.gmra.mxu0 %v236
    %v273 = vpop.f32.mrf.mxu0
    %v274 = vadd.f32 %v151, %v273
    %v275 = vpop.f32.mrf.mxu0
    %276 = vdwg.mxu0
    %277 = vmatpush.bf16.msra.mxu0 0
    %278 = vmatpush.bf16.msra.mxu0 0
    %279 = vmatpush.bf16.msra.mxu0 0
    %280 = vmatpush.bf16.msra.mxu0 0
    %281 = vmatpush.bf16.msra.mxu0 0
    %282 = vmatpush.bf16.msra.mxu0 0
    %283 = vmatpush.bf16.msra.mxu0 %v217
    %284 = vmatpush.bf16.msra.mxu0 %v210
    %285 = vmatmul.bf16.gmra.mxu0 %v236
    %v286 = vpop.f32.mrf.mxu0
    %v287 = vadd.f32 %v152, %v286
    %v288 = vpop.f32.mrf.mxu0
    %289 = vdwg.mxu0
    %290 = vmatpush.bf16.msra.mxu0 0
    %291 = vmatpush.bf16.msra.mxu0 0
    %292 = vmatpush.bf16.msra.mxu0 0
    %293 = vmatpush.bf16.msra.mxu0 0
    %294 = vmatpush.bf16.msra.mxu0 0
    %295 = vmatpush.bf16.msra.mxu0 0
    %296 = vmatpush.bf16.msra.mxu0 %v218
    %297 = vmatpush.bf16.msra.mxu0 %v211
    %298 = vmatmul.bf16.gmra.mxu0 %v236
    %v299 = vpop.f32.mrf.mxu0
    %v300 = vadd.f32 %v153, %v299
    %v301 = vpop.f32.mrf.mxu0
    %302 = vdwg.mxu0
    %303 = vmatpush.bf16.msra.mxu0 0
    %304 = vmatpush.bf16.msra.mxu0 0
    %305 = vmatpush.bf16.msra.mxu0 0
    %306 = vmatpush.bf16.msra.mxu0 0
    %307 = vmatpush.bf16.msra.mxu0 0
    %308 = vmatpush.bf16.msra.mxu0 0
    %309 = vmatpush.bf16.msra.mxu0 %v219
    %310 = vmatpush.bf16.msra.mxu0 %v212
    %311 = vmatmul.bf16.gmra.mxu0 %v236
    %v312 = vpop.f32.mrf.mxu0
    %v313 = vadd.f32 %v154, %v312
    %v314 = vpop.f32.mrf.mxu0
    %315 = vdwg.mxu0
    %316 = vmatpush.bf16.msra.mxu0 0
    %317 = vmatpush.bf16.msra.mxu0 0
    %318 = vmatpush.bf16.msra.mxu0 0
    %319 = vmatpush.bf16.msra.mxu0 0
    %320 = vmatpush.bf16.msra.mxu0 0
    %321 = vmatpush.bf16.msra.mxu0 0
    %322 = vmatpush.bf16.msra.mxu0 %v220
    %323 = vmatpush.bf16.msra.mxu0 %v213
    %324 = vmatmul.bf16.gmra.mxu0 %v236
    %v325 = vpop.f32.mrf.mxu0
    %v326 = vadd.f32 %v155, %v325
    %v327 = vpop.f32.mrf.mxu0
    %328 = vdwg.mxu0
    %v329 = vxor.u32 %v248, 2147483648
    %v330 = vxor.u32 %v261, 2147483648
    %v331 = vxor.u32 %v274, 2147483648
    %v332 = vxor.u32 %v287, 2147483648
    %v333 = vxor.u32 %v300, 2147483648
    %v334 = vxor.u32 %v313, 2147483648
    %v335 = vxor.u32 %v326, 2147483648
    %v336 = vmul.f32 %v329, 1.442695
    %v337 = vpow.pop %v336
    %v338 = vmul.f32 %v330, 1.442695
    %v339 = vpow.pop %v338
    %v340 = vmul.f32 %v331, 1.442695
    %v341 = vpow.pop %v340
    %v342 = vmul.f32 %v332, 1.442695
    %v343 = vpow.pop %v342
    %v344 = vmul.f32 %v333, 1.442695
    %v345 = vpow.pop %v344
    %v346 = vmul.f32 %v334, 1.442695
    %v347 = vpow.pop %v346
    %v348 = vmul.f32 %v335, 1.442695
    %v349 = vpow.pop %v348
    %v350 = vadd.f32 %v337, 1.0
    %v351 = vadd.f32 %v339, 1.0
    %v352 = vadd.f32 %v341, 1.0
    %v353 = vadd.f32 %v343, 1.0
    %v354 = vadd.f32 %v345, 1.0
    %v355 = vadd.f32 %v347, 1.0
    %v356 = vadd.f32 %v349, 1.0
    %v357 = vrcp.pop %v350
    %v358 = vmul.f32 %v350, %v357
    %v359 = vsub.f32 1.0, %v358
    %v360 = vmul.f32 %v357, %v359
    %v361 = vadd.f32 %v357, %v360
    %vm362 = vweird.f32 %v350
    %vm363 = vweird.f32 %v357
    %vm364 = vmor %vm362, %vm363
    %v365 = vsel %vm364, %v357, %v361
    %v366 = vand.u32 2147483647, %v350
    %vm367 = vcmp.eq.f32.partialorder %v366, 8.507059e+37
    %v368 = vand.u32 %v350, 2147483648
    %v369 = vor.u32 1.1754944e-38, %v368
    %v370 = vsel %vm367, %v369, %v365
    %v371 = vmul.f32 1.0, %v370
    %v372 = vrcp.pop %v351
    %v373 = vmul.f32 %v351, %v372
    %v374 = vsub.f32 1.0, %v373
    %v375 = vmul.f32 %v372, %v374
    %v376 = vadd.f32 %v372, %v375
    %vm377 = vweird.f32 %v351
    %vm378 = vweird.f32 %v372
    %vm379 = vmor %vm377, %vm378
    %v380 = vsel %vm379, %v372, %v376
    %v381 = vand.u32 2147483647, %v351
    %vm382 = vcmp.eq.f32.partialorder %v381, 8.507059e+37
    %v383 = vand.u32 %v351, 2147483648
    %v384 = vor.u32 1.1754944e-38, %v383
    %v385 = vsel %vm382, %v384, %v380
    %v386 = vmul.f32 1.0, %v385
    %v387 = vrcp.pop %v352
    %v388 = vmul.f32 %v352, %v387
    %v389 = vsub.f32 1.0, %v388
    %v390 = vmul.f32 %v387, %v389
    %v391 = vadd.f32 %v387, %v390
    %vm392 = vweird.f32 %v352
    %vm393 = vweird.f32 %v387
    %vm394 = vmor %vm392, %vm393
    %v395 = vsel %vm394, %v387, %v391
    %v396 = vand.u32 2147483647, %v352
    %vm397 = vcmp.eq.f32.partialorder %v396, 8.507059e+37
    %v398 = vand.u32 %v352, 2147483648
    %v399 = vor.u32 1.1754944e-38, %v398
    %v400 = vsel %vm397, %v399, %v395
    %v401 = vmul.f32 1.0, %v400
    %v402 = vrcp.pop %v353
    %v403 = vmul.f32 %v353, %v402
    %v404 = vsub.f32 1.0, %v403
    %v405 = vmul.f32 %v402, %v404
    %v406 = vadd.f32 %v402, %v405
    %vm407 = vweird.f32 %v353
    %vm408 = vweird.f32 %v402
    %vm409 = vmor %vm407, %vm408
    %v410 = vsel %vm409, %v402, %v406
    %v411 = vand.u32 2147483647, %v353
    %vm412 = vcmp.eq.f32.partialorder %v411, 8.507059e+37
    %v413 = vand.u32 %v353, 2147483648
    %v414 = vor.u32 1.1754944e-38, %v413
    %v415 = vsel %vm412, %v414, %v410
    %v416 = vmul.f32 1.0, %v415
    %v417 = vrcp.pop %v354
    %v418 = vmul.f32 %v354, %v417
    %v419 = vsub.f32 1.0, %v418
    %v420 = vmul.f32 %v417, %v419
    %v421 = vadd.f32 %v417, %v420
    %vm422 = vweird.f32 %v354
    %vm423 = vweird.f32 %v417
    %vm424 = vmor %vm422, %vm423
    %v425 = vsel %vm424, %v417, %v421
    %v426 = vand.u32 2147483647, %v354
    %vm427 = vcmp.eq.f32.partialorder %v426, 8.507059e+37
    %v428 = vand.u32 %v354, 2147483648
    %v429 = vor.u32 1.1754944e-38, %v428
    %v430 = vsel %vm427, %v429, %v425
    %v431 = vmul.f32 1.0, %v430
    %v432 = vrcp.pop %v355
    %v433 = vmul.f32 %v355, %v432
    %v434 = vsub.f32 1.0, %v433
    %v435 = vmul.f32 %v432, %v434
    %v436 = vadd.f32 %v432, %v435
    %vm437 = vweird.f32 %v355
    %vm438 = vweird.f32 %v432
    %vm439 = vmor %vm437, %vm438
    %v440 = vsel %vm439, %v432, %v436
    %v441 = vand.u32 2147483647, %v355
    %vm442 = vcmp.eq.f32.partialorder %v441, 8.507059e+37
    %v443 = vand.u32 %v355, 2147483648
    %v444 = vor.u32 1.1754944e-38, %v443
    %v445 = vsel %vm442, %v444, %v440
    %v446 = vmul.f32 1.0, %v445
    %v447 = vrcp.pop %v356
    %v448 = vmul.f32 %v356, %v447
    %v449 = vsub.f32 1.0, %v448
    %v450 = vmul.f32 %v447, %v449
    %v451 = vadd.f32 %v447, %v450
    %vm452 = vweird.f32 %v356
    %vm453 = vweird.f32 %v447
    %vm454 = vmor %vm452, %vm453
    %v455 = vsel %vm454, %v447, %v451
    %v456 = vand.u32 2147483647, %v356
    %vm457 = vcmp.eq.f32.partialorder %v456, 8.507059e+37
    %v458 = vand.u32 %v356, 2147483648
    %v459 = vor.u32 1.1754944e-38, %v458
    %v460 = vsel %vm457, %v459, %v455
    %v461 = vmul.f32 1.0, %v460
    %462 = vst [vmem:[%s7] sm:$0xff] %v371
    %463 = vst [vmem:[%s7 + $0x8] sm:$0xff] %v386
    %464 = vst [vmem:[%s7 + $0x10] sm:$0xff] %v401
    %465 = vst [vmem:[%s7 + $0x18] sm:$0xff] %v416
    %466 = vst [vmem:[%s7 + $0x20] sm:$0xff] %v431
    %467 = vst [vmem:[%s7 + $0x28] sm:$0xff] %v446
    %vm468 = vcmask 130048
    %469 = vst.msk [vmem:[%s7 + $0x30] sm:$0xff] %vm468, %v461
    // Predicated region
    $region38: #{_lambda_.1} parent=1 // pred_check
      _
    $region39: #{_lambda_.1} parent=1 // pred_check_branch
      %471 = sbr.rel (0) target = $region41
    $region40: #{_lambda_.1} parent=1 // pred_region
      _
    $region41: #{_lambda_.1} parent=1 // pred_fallthru
      _
    // Predicated region
    $region42: #{_lambda_.1} parent=1 // pred_check
      _
    $region43: #{_lambda_.1} parent=1 // pred_check_branch
      %473 = sbr.rel (0) target = $region45
    $region44: #{_lambda_.1} parent=1 // pred_region
      _
    $region45: #{_lambda_.1} parent=1 // pred_fallthru
      _
    %474 = vsyncpa [#allocation3], 1
    %475 = vsyncpa [#allocation5], 1

</llo_original>
